<compile_context>
chip_gen: v6e
topology: v6e:2x2x1
jax: 0.10.0
libtpu: 0.0.40
codegen_flags: <defaults>
</compile_context>

<pallas_src>
import math

import numpy as np
import jax
import jax.numpy as jnp
from jax.experimental import pallas as pl
from jax.experimental.pallas import tpu as pltpu


def _round_up(x, m):
    return (x + m - 1) // m * m


def _make_biaffine_kernel(o_fold, Dp, tn, rd_resident):
    def kernel(rh_ref, u_ref, rd_ref, out_ref, tmp_ref):
        # rh_ref : (1, tm, Dp)             bf16  -- block for (b, i)
        # u_ref  : (1, Dp, o_fold*Dp)      bf16  -- folded U slab for block o
        # rd_ref : (1, Sp_j, Dp) resident  bf16  (or (1, tn, Dp) when streamed)
        # out_ref: (1, o_fold, tm, tn)     out dtype
        # tmp_ref: (tm, o_fold*Dp)         bf16 scratch (persists across j)
        j = pl.program_id(3)

        # Hoisted first matmul: computed once per (b, o, i) output row, reused
        # across every j tile.  Stored directly in bf16 (no per-step cast).
        @pl.when(j == 0)
        def _():
            tmp_ref[...] = jnp.dot(
                rh_ref[0], u_ref[0], preferred_element_type=jnp.float32
            ).astype(jnp.bfloat16)

        if rd_resident:
            start = pl.multiple_of(j * tn, tn)
            rd_tile = rd_ref[0, pl.ds(start, tn), :]
        else:
            rd_tile = rd_ref[0]

        # Second contraction: NT dot (contract trailing hidden dim of both), the
        # same pattern as flash-attention q.k^T, so no XLU transpose is emitted.
        for of in range(o_fold):
            t = tmp_ref[:, of * Dp:(of + 1) * Dp]
            s = jax.lax.dot_general(
                t, rd_tile,
                dimension_numbers=(((1,), (1,)), ((), ())),
                preferred_element_type=jnp.float32,
            )
            out_ref[0, of] = s.astype(out_ref.dtype)

    return kernel


def biaffine_forward(Rh, Rd, U, *, seq_tile=512, out_dtype=jnp.float32,
                     vmem_budget_bytes=40 * 1024 * 1024):
    """Biaffine forward: einsum('bip,opq,bjq->boij') with torch-style squeeze(1).

    Inputs are cast to bf16 (f32 accumulation on both MXU matmuls).  out_dtype
    defaults to f32 to match torch; pass jnp.bfloat16 to halve output HBM writes
    at a small precision cost.
    """
    B, S, D = Rh.shape
    O = U.shape[0]

    Dp = _round_up(D, 128)
    # i (sublane) axis only needs 8-granularity; j (lane) axis needs 128 for
    # lane-dense, unmasked stores.
    tm = min(_round_up(seq_tile, 8), _round_up(S, 8))
    tn = min(_round_up(seq_tile, 128), _round_up(S, 128))
    Sp_i = _round_up(S, tm)
    Sp_j = _round_up(S, tn)
    out_itemsize = np.dtype(out_dtype).itemsize

    def vmem_estimate(o_fold, rd_rows):
        return (2 * tm * Dp * 2                         # Rh (bf16, 2 buffers)
                + 2 * Dp * o_fold * Dp * 2              # folded U slab (bf16)
                + 2 * rd_rows * Dp * 2                  # Rd (bf16)
                + 2 * o_fold * tm * tn * out_itemsize   # output tile
                + tm * o_fold * Dp * 2)                 # tmp scratch (bf16)

    # Fold as many output channels into the hoisted matmul as the VMEM budget
    # allows (largest divisor of O that fits).
    o_fold = 1
    for cand in range(O, 0, -1):
        if O % cand == 0 and vmem_estimate(cand, tn) <= vmem_budget_bytes:
            o_fold = cand
            break
    # TODO(synk): for very large O*Dp^2 even o_fold=1 may exceed the budget; a
    # K-tiled first matmul would be needed there.

    # Keep Rd[b] fully VMEM-resident when it fits: eliminates the per-row
    # re-streaming of Rd from HBM (the dominant input-DMA term).
    rd_resident = vmem_estimate(o_fold, Sp_j) <= vmem_budget_bytes
    rd_rows = Sp_j if rd_resident else tn
    est = vmem_estimate(o_fold, rd_rows)

    O_grid = O // o_fold
    gi = Sp_i // tm
    gj = Sp_j // tn

    # bf16 inputs; zero padding of the hidden dim is exact, padded seq rows/cols
    # are sliced off after the call.
    Rh_b = jnp.pad(Rh.astype(jnp.bfloat16), ((0, 0), (0, Sp_i - S), (0, Dp - D)))
    Rd_b = jnp.pad(Rd.astype(jnp.bfloat16), ((0, 0), (0, Sp_j - S), (0, Dp - D)))
    U_b = jnp.pad(U.astype(jnp.bfloat16), ((0, 0), (0, Dp - D), (0, Dp - D)))
    # U_all[g, p, of*Dp + q] = U[g*o_fold + of, p, q]
    U_all = (U_b.reshape(O_grid, o_fold, Dp, Dp)
                 .transpose(0, 2, 1, 3)
                 .reshape(O_grid, Dp, o_fold * Dp))

    if rd_resident:
        rd_spec = pl.BlockSpec((1, Sp_j, Dp), lambda b, o, i, j: (b, 0, 0))
    else:
        rd_spec = pl.BlockSpec((1, tn, Dp), lambda b, o, i, j: (b, j, 0))

    kernel = _make_biaffine_kernel(o_fold, Dp, tn, rd_resident)

    out = pl.pallas_call(
        kernel,
        out_shape=jax.ShapeDtypeStruct((B, O, Sp_i, Sp_j), out_dtype),
        grid_spec=pltpu.PrefetchScalarGridSpec(
            num_scalar_prefetch=0,
            grid=(B, O_grid, gi, gj),
            in_specs=[
                pl.BlockSpec((1, tm, Dp), lambda b, o, i, j: (b, i, 0)),          # Rh
                pl.BlockSpec((1, Dp, o_fold * Dp), lambda b, o, i, j: (o, 0, 0)), # U
                rd_spec,                                                          # Rd
            ],
            out_specs=pl.BlockSpec((1, o_fold, tm, tn),
                                   lambda b, o, i, j: (b, o, i, j)),
            scratch_shapes=[pltpu.VMEM((tm, o_fold * Dp), jnp.bfloat16)],
        ),
        compiler_params=pltpu.CompilerParams(
            # j is "arbitrary": the tmp scratch carries state across the S_d
            # axis (recomputed at j == 0); b/o/i can shard across TensorCores.
            dimension_semantics=("parallel", "parallel", "parallel", "arbitrary"),
            # Explicit VMEM limit; capped so the same config fits v7x's 64 MiB.
            vmem_limit_bytes=int(min(max(est * 5 // 4, 32 * 1024 * 1024),
                                     56 * 1024 * 1024)),
        ),
    )(Rh_b, U_all, Rd_b)

    out = out[:, :, :S, :S]
    # torch .squeeze(1): only drops the dim if output_dim == 1
    if out.shape[1] == 1:
        out = jnp.squeeze(out, axis=1)
    return out


def xavier_uniform_3d(key, shape):
    # PyTorch xavier_uniform on (O, D, D):
    #   receptive_field = D, fan_in = D*D, fan_out = O*D
    O, D1, D2 = shape
    fan_in = D1 * D2
    fan_out = O * D2
    bound = math.sqrt(6.0 / (fan_in + fan_out))
    return jax.random.uniform(key, shape, jnp.float32, minval=-bound, maxval=bound)


if __name__ == "__main__":
    batch, seq, input_dim, output_dim = 2, 8, 32, 4

    key = jax.random.PRNGKey(0)
    k_u, k_h, k_d = jax.random.split(key, 3)

    U = xavier_uniform_3d(k_u, (output_dim, input_dim, input_dim))
    Rh = jax.random.normal(k_h, (batch, seq, input_dim), jnp.float32)
    Rd = jax.random.normal(k_d, (batch, seq, input_dim), jnp.float32)

    S_out = biaffine_forward(Rh, Rd, U)
    S_out = jax.block_until_ready(S_out)

    # Sanity check against a plain-JAX reference on bf16-rounded inputs (the
    # kernel also rounds the Rh@U intermediate to bf16 before the second MXU
    # pass, hence the loose tolerance).
    ref = jnp.einsum(
        "bip,opq,bjq->boij",
        Rh.astype(jnp.bfloat16).astype(jnp.float32),
        U.astype(jnp.bfloat16).astype(jnp.float32),
        Rd.astype(jnp.bfloat16).astype(jnp.float32),
    )
    assert S_out.shape == (batch, output_dim, seq, seq)
    assert jnp.allclose(S_out, ref, atol=5e-2, rtol=5e-2)

    print("KERNEL_OK")
</pallas_src>

<mosaic_0001>
module attributes {stable_mosaic.version = 11 : i64} {
  func.func @kernel(%arg0: i32, %arg1: i32, %arg2: i32, %arg3: i32, %arg4: memref<1x8x128xbf16, #tpu.memory_space<vmem>>, %arg5: memref<1x128x512xbf16, #tpu.memory_space<vmem>>, %arg6: memref<1x128x128xbf16, #tpu.memory_space<vmem>>, %arg7: memref<1x4x8x128xf32, #tpu.memory_space<vmem>>, %arg8: memref<8x512xbf16, #tpu.memory_space<vmem>>) attributes {dimension_semantics = [#tpu.dimension_semantics<parallel>, #tpu.dimension_semantics<parallel>, #tpu.dimension_semantics<parallel>, #tpu.dimension_semantics<arbitrary>], iteration_bounds = array<i64: 2, 1, 1, 1>, scalar_prefetch = 0 : i64, scratch_operands = 1 : i64, tpu.core_type = #tpu.core_type<tc>, window_params = [{transform_indices = @transform_0, window_bounds = array<i64: 1, 8, 128>}, {transform_indices = @transform_1, window_bounds = array<i64: 1, 128, 512>}, {transform_indices = @transform_2, window_bounds = array<i64: 1, 128, 128>}, {transform_indices = @transform_3, window_bounds = array<i64: 1, 4, 8, 128>}]} {
    %c0_i32 = arith.constant 0 : i32
    %0 = arith.cmpi eq, %arg3, %c0_i32 : i32
    %1 = arith.extui %0 : i1 to i32
    %c0_i32_0 = arith.constant 0 : i32
    %2 = arith.cmpi ne, %1, %c0_i32_0 : i32
    scf.if %2 {
      %c0_23 = arith.constant 0 : index
      %c0_24 = arith.constant 0 : index
      %c0_25 = arith.constant 0 : index
      %28 = vector.load %arg4[%c0_23, %c0_24, %c0_25] : memref<1x8x128xbf16, #tpu.memory_space<vmem>>, vector<1x8x128xbf16>
      %29 = vector.shape_cast %28 : vector<1x8x128xbf16> to vector<8x128xbf16>
      %c0_26 = arith.constant 0 : index
      %c0_27 = arith.constant 0 : index
      %c0_28 = arith.constant 0 : index
      %30 = vector.load %arg5[%c0_26, %c0_27, %c0_28] : memref<1x128x512xbf16, #tpu.memory_space<vmem>>, vector<1x128x512xbf16>
      %31 = vector.shape_cast %30 : vector<1x128x512xbf16> to vector<128x512xbf16>
      %cst_29 = arith.constant dense<0.000000e+00> : vector<8x512xf32>
      %32 = tpu.matmul %29, %31, %cst_29 {dimension_numbers = #tpu.dot_dimension_numbers<[1], [0], [0], [1], [0, 0, 1, 1], [], []>} : vector<8x128xbf16>, vector<128x512xbf16>, vector<8x512xf32> -> vector<8x512xf32>
      %33 = arith.truncf %32 : vector<8x512xf32> to vector<8x512xbf16>
      %c0_30 = arith.constant 0 : index
      %c0_31 = arith.constant 0 : index
      %34 = vector.load %arg8[%c0_30, %c0_31] : memref<8x512xbf16, #tpu.memory_space<vmem>>, vector<8x512xbf16>
      tpu.vector_store %arg8[%c0_30, %c0_31], %33 {strides = array<i32>} : memref<8x512xbf16, #tpu.memory_space<vmem>>, vector<8x512xbf16>,
    } else {
    }
    %c128_i32 = arith.constant 128 : i32
    %3 = arith.muli %arg3, %c128_i32 : i32
    %4 = tpu.assume_multiple %3, 128 : i32
    %c0 = arith.constant 0 : index
    %5 = arith.index_cast %4 : i32 to index
    %c0_1 = arith.constant 0 : index
    %6 = vector.load %arg6[%c0, %5, %c0_1] : memref<1x128x128xbf16, #tpu.memory_space<vmem>>, vector<1x128x128xbf16>
    %7 = vector.shape_cast %6 : vector<1x128x128xbf16> to vector<128x128xbf16>
    %c0_2 = arith.constant 0 : index
    %c0_3 = arith.constant 0 : index
    %8 = vector.load %arg8[%c0_2, %c0_3] : memref<8x512xbf16, #tpu.memory_space<vmem>>, vector<8x128xbf16>
    %cst = arith.constant dense<0.000000e+00> : vector<8x128xf32>
    %9 = tpu.matmul %8, %7, %cst {dimension_numbers = #tpu.dot_dimension_numbers<[1], [1], [0], [0], [0, 0, 1, 0], [], []>} : vector<8x128xbf16>, vector<128x128xbf16>, vector<8x128xf32> -> vector<8x128xf32>
    %c0_4 = arith.constant 0 : index
    %c0_5 = arith.constant 0 : index
    %c0_6 = arith.constant 0 : index
    %c0_7 = arith.constant 0 : index
    %10 = vector.load %arg7[%c0_4, %c0_5, %c0_6, %c0_7] : memref<1x4x8x128xf32, #tpu.memory_space<vmem>>, vector<1x1x8x128xf32>
    %11 = vector.shape_cast %10 : vector<1x1x8x128xf32> to vector<8x128xf32>
    %12 = vector.shape_cast %9 : vector<8x128xf32> to vector<1x1x8x128xf32>
    tpu.vector_store %arg7[%c0_4, %c0_5, %c0_6, %c0_7], %12 {strides = array<i32>} : memref<1x4x8x128xf32, #tpu.memory_space<vmem>>, vector<1x1x8x128xf32>,
    %c0_8 = arith.constant 0 : index
    %c128 = arith.constant 128 : index
    %13 = vector.load %arg8[%c0_8, %c128] : memref<8x512xbf16, #tpu.memory_space<vmem>>, vector<8x128xbf16>
    %cst_9 = arith.constant dense<0.000000e+00> : vector<8x128xf32>
    %14 = tpu.matmul %13, %7, %cst_9 {dimension_numbers = #tpu.dot_dimension_numbers<[1], [1], [0], [0], [0, 0, 1, 0], [], []>} : vector<8x128xbf16>, vector<128x128xbf16>, vector<8x128xf32> -> vector<8x128xf32>
    %c0_10 = arith.constant 0 : index
    %c1 = arith.constant 1 : index
    %c0_11 = arith.constant 0 : index
    %c0_12 = arith.constant 0 : index
    %15 = vector.load %arg7[%c0_10, %c1, %c0_11, %c0_12] : memref<1x4x8x128xf32, #tpu.memory_space<vmem>>, vector<1x1x8x128xf32>
    %16 = vector.shape_cast %15 : vector<1x1x8x128xf32> to vector<8x128xf32>
    %17 = vector.shape_cast %14 : vector<8x128xf32> to vector<1x1x8x128xf32>
    tpu.vector_store %arg7[%c0_10, %c1, %c0_11, %c0_12], %17 {strides = array<i32>} : memref<1x4x8x128xf32, #tpu.memory_space<vmem>>, vector<1x1x8x128xf32>,
    %c0_13 = arith.constant 0 : index
    %c256 = arith.constant 256 : index
    %18 = vector.load %arg8[%c0_13, %c256] : memref<8x512xbf16, #tpu.memory_space<vmem>>, vector<8x128xbf16>
    %cst_14 = arith.constant dense<0.000000e+00> : vector<8x128xf32>
    %19 = tpu.matmul %18, %7, %cst_14 {dimension_numbers = #tpu.dot_dimension_numbers<[1], [1], [0], [0], [0, 0, 1, 0], [], []>} : vector<8x128xbf16>, vector<128x128xbf16>, vector<8x128xf32> -> vector<8x128xf32>
    %c0_15 = arith.constant 0 : index
    %c2 = arith.constant 2 : index
    %c0_16 = arith.constant 0 : index
    %c0_17 = arith.constant 0 : index
    %20 = vector.load %arg7[%c0_15, %c2, %c0_16, %c0_17] : memref<1x4x8x128xf32, #tpu.memory_space<vmem>>, vector<1x1x8x128xf32>
    %21 = vector.shape_cast %20 : vector<1x1x8x128xf32> to vector<8x128xf32>
    %22 = vector.shape_cast %19 : vector<8x128xf32> to vector<1x1x8x128xf32>
    tpu.vector_store %arg7[%c0_15, %c2, %c0_16, %c0_17], %22 {strides = array<i32>} : memref<1x4x8x128xf32, #tpu.memory_space<vmem>>, vector<1x1x8x128xf32>,
    %c0_18 = arith.constant 0 : index
    %c384 = arith.constant 384 : index
    %23 = vector.load %arg8[%c0_18, %c384] : memref<8x512xbf16, #tpu.memory_space<vmem>>, vector<8x128xbf16>
    %cst_19 = arith.constant dense<0.000000e+00> : vector<8x128xf32>
    %24 = tpu.matmul %23, %7, %cst_19 {dimension_numbers = #tpu.dot_dimension_numbers<[1], [1], [0], [0], [0, 0, 1, 0], [], []>} : vector<8x128xbf16>, vector<128x128xbf16>, vector<8x128xf32> -> vector<8x128xf32>
    %c0_20 = arith.constant 0 : index
    %c3 = arith.constant 3 : index
    %c0_21 = arith.constant 0 : index
    %c0_22 = arith.constant 0 : index
    %25 = vector.load %arg7[%c0_20, %c3, %c0_21, %c0_22] : memref<1x4x8x128xf32, #tpu.memory_space<vmem>>, vector<1x1x8x128xf32>
    %26 = vector.shape_cast %25 : vector<1x1x8x128xf32> to vector<8x128xf32>
    %27 = vector.shape_cast %24 : vector<8x128xf32> to vector<1x1x8x128xf32>
    tpu.vector_store %arg7[%c0_20, %c3, %c0_21, %c0_22], %27 {strides = array<i32>} : memref<1x4x8x128xf32, #tpu.memory_space<vmem>>, vector<1x1x8x128xf32>,
    return
  }
  func.func @transform_0(%arg0: i32, %arg1: i32, %arg2: i32, %arg3: i32) -> (i32, i32, i32) {
    %c0_i32 = arith.constant 0 : i32
    %c0_i32_0 = arith.constant 0 : i32
    return %arg0, %arg2, %c0_i32 : i32, i32, i32
  }
  func.func @transform_1(%arg0: i32, %arg1: i32, %arg2: i32, %arg3: i32) -> (i32, i32, i32) {
    %c0_i32 = arith.constant 0 : i32
    %c0_i32_0 = arith.constant 0 : i32
    %c0_i32_1 = arith.constant 0 : i32
    return %arg1, %c0_i32, %c0_i32_0 : i32, i32, i32
  }
  func.func @transform_2(%arg0: i32, %arg1: i32, %arg2: i32, %arg3: i32) -> (i32, i32, i32) {
    %c0_i32 = arith.constant 0 : i32
    %c0_i32_0 = arith.constant 0 : i32
    %c0_i32_1 = arith.constant 0 : i32
    return %arg0, %c0_i32, %c0_i32_0 : i32, i32, i32
  }
  func.func @transform_3(%arg0: i32, %arg1: i32, %arg2: i32, %arg3: i32) -> (i32, i32, i32, i32) {
    %c0_i32 = arith.constant 0 : i32
    return %arg0, %arg1, %arg2, %arg3 : i32, i32, i32, i32
  }
}

</mosaic_0001>

<llo_original>
// kernel: tpu_custom_call.1
$region0: #{tpu_custom_call.1}
  #allocation0 [shape = 'u32[]', space=smem, size = 0x4, offset = 0x4, fixed_abs, tag = 'smem constant byte address 0x4 - core index']
  #allocation1 [shape = 'u32[144,128]{1,0:T(1,128)}', space=vmem, size = 0x12000, scoped, tag = 'internal scratch']
  #allocation2 [shape = 'bf16[8,512]{1,0:T(8,128)(2,1)}', space=vmem, size = 0x2000, scoped, tag = 'scratch operand']
  %s0 = inlined_call_operand.hbm [shape: bf16[2,8,128], index: 0, kind: input, shape index: {}]
  %s1 = inlined_call_operand.hbm [shape: bf16[1,128,512], index: 1, kind: input, shape index: {}]
  %s2 = inlined_call_operand.hbm [shape: bf16[2,128,128], index: 2, kind: input, shape index: {}]
  %s3 = inlined_call_operand.hbm [shape: f32[2,4,8,128], index: 3, kind: output, shape index: {}]
  %s4 = sld [smem:[#allocation0]]
  $region61: #{tpu_custom_call.1} parent=0
    _
  %s6 = ssub.s32 1, %s4
  %s7 = scalar_select 0, %s6, %s4
  $region1: #{tpu_custom_call.1} parent=0
    #allocation3 [shape = 'u8[4096]{0}', space=vmem, size = 0x1000, scoped, tag = 'input window, operand 0']
    #allocation4 [shape = 's32[2]{0}', space=sflag, size = 0x8, scoped, tag = 'scoped memory for tpu_custom_call.1']
    #allocation5 [shape = 's32[2]{0}', space=sflag, size = 0x8, scoped, tag = 'scoped memory for tpu_custom_call.1']
    #allocation6 [shape = 'u8[131072]{0}', space=vmem, size = 0x20000, scoped, tag = 'input window, operand 1, single buffered']
    #allocation7 [shape = 's32[1]{0}', space=sflag, size = 0x4, scoped, tag = 'scoped memory for tpu_custom_call.1']
    #allocation8 [shape = 'u8[65536]{0}', space=vmem, size = 0x10000, scoped, tag = 'input window, operand 2']
    #allocation9 [shape = 'u8[32768]{0}', space=vmem, size = 0x8000, scoped, tag = 'output window, operand 0']
    %8 = vsyncpa [#allocation4], 0
    %s9 = scalar_lea.sflag [#allocation4], 1
    %10 = vsyncpa %s9, 0
    %11 = vsyncpa [#allocation7], 0
    %12 = vsyncpa [#allocation5], 0
    %s13 = scalar_lea.sflag [#allocation5], 1
    %14 = vsyncpa %s13, 0
    loop: start=0, step=1, limit=4
    $region2: #{tpu_custom_call.1} parent=1 // loop_pre_header
      _
    $region3: #{tpu_custom_call.1} parent=1 // loop_header
      %s16 = sphi 0, %s20
      %p17 = scmp.ge.s32.totalorder %s16, 4
      %s23 = sphi 0, %s49
      %s24 = sphi 0, %s45
      %s25 = sphi 0, %s41
      %s26 = sphi 0, %s37
      %s27 = sphi 0, %s23
      %s28 = sphi 0, %s24
      %s29 = sphi 0, %s25
      %s30 = sphi 0, %s26
      %s31 = sphi 0, %s27
      %s32 = sphi 0, %s28
      %s33 = sphi 0, %s29
      %s34 = sphi 0, %s30
      %s54 = sphi 0, %s56
      %s57 = sphi 0, %s54
      %s58 = sphi 0, %s57
      %s74 = sphi 0, %s58
      %s80 = sphi 0, %s82
      %s83 = sphi 0, %s80
      %s84 = sphi 0, %s83
      %s100 = sphi 0, %s84
      %s106 = sphi 0, %s108
      %s109 = sphi 0, %s106
      %s110 = sphi 0, %s109
      %s126 = sphi 0, %s110
      %s138 = sphi 0, %s140
      %s141 = sphi 0, %s138
      %s142 = sphi 0, %s141
      %s158 = sphi 0, %s142
    $region4: #{tpu_custom_call.1} parent=1 // loop_header_branch
      %19 = sbr.rel (%p17) target = $region8
    $region5: #{tpu_custom_call.1} parent=1 // loop_body
      %s21 = ssub.s32 %s16, 1
      %s22 = ssub.s32 %s16, 2
      %s35 = sadd.s32 1, %s26
      %p36 = scmp.ge.s32.totalorder %s35, 1
      %s37 = scalar_select %p36, 0, %s35
      %s38 = sadd.s32 1, %s25
      %s39 = scalar_select %p36, %s38, %s25
      %p40 = scmp.ge.s32.totalorder %s39, 1
      %s41 = scalar_select %p40, 0, %s39
      %s42 = sadd.s32 1, %s24
      %s43 = scalar_select %p40, %s42, %s24
      %p44 = scmp.ge.s32.totalorder %s43, 1
      %s45 = scalar_select %p44, 0, %s43
      %s46 = sadd.s32 1, %s23
      %s47 = scalar_select %p44, %s46, %s23
      %p48 = scmp.ge.s32.totalorder %s47, 2
      %s49 = scalar_select %p48, 0, %s47
      %s50 = ssub.s32 %s23, %s49
      %s51 = ssub.s32 %s25, %s41
      %s52 = sor.u32 %s50, %s51
      %p53 = scmp.eq.s32.totalorder %s52, 0
      %s55 = sadd.s32 %s54, 1
      %s56 = scalar_select %p53, %s54, %s55
      %p59 = pneg %p53
      %p60 = scmp.eq.s32.totalorder %s16, 1
      %p61 = por %p59, %p60
      %p62 = scmp.ne.s32.totalorder %s54, %s57
      %p63 = scmp.eq.s32.totalorder %s16, 0
      %p64 = por %p62, %p63
      %p65 = scmp.ne.s32.totalorder %s54, %s57
      %p66 = scmp.eq.s32.totalorder %s21, 1
      %p67 = por %p65, %p66
      %p68 = scmp.ne.s32.totalorder %s57, %s58
      %p69 = scmp.eq.s32.totalorder %s21, 0
      %p70 = por %p68, %p69
      %p71 = scmp.ne.s32.totalorder %s57, %s58
      %p72 = scmp.eq.s32.totalorder %s22, 1
      %p73 = por %p71, %p72
      %p75 = scmp.ne.s32.totalorder %s58, %s74
      %p76 = scmp.eq.s32.totalorder %s22, 0
      %p77 = por %p75, %p76
      %s78 = ssub.s32 %s24, %s45
      %p79 = scmp.eq.s32.totalorder %s78, 0
      %s81 = sadd.s32 %s80, 1
      %s82 = scalar_select %p79, %s80, %s81
      %p85 = pneg %p79
      %p86 = scmp.eq.s32.totalorder %s16, 1
      %p87 = por %p85, %p86
      %p88 = scmp.ne.s32.totalorder %s80, %s83
      %p89 = scmp.eq.s32.totalorder %s16, 0
      %p90 = por %p88, %p89
      %p91 = scmp.ne.s32.totalorder %s80, %s83
      %p92 = scmp.eq.s32.totalorder %s21, 1
      %p93 = por %p91, %p92
      %p94 = scmp.ne.s32.totalorder %s83, %s84
      %p95 = scmp.eq.s32.totalorder %s21, 0
      %p96 = por %p94, %p95
      %p97 = scmp.ne.s32.totalorder %s83, %s84
      %p98 = scmp.eq.s32.totalorder %s22, 1
      %p99 = por %p97, %p98
      %p101 = scmp.ne.s32.totalorder %s84, %s100
      %p102 = scmp.eq.s32.totalorder %s22, 0
      %p103 = por %p101, %p102
      %s104 = ssub.s32 %s23, %s49
      %p105 = scmp.eq.s32.totalorder %s104, 0
      %s107 = sadd.s32 %s106, 1
      %s108 = scalar_select %p105, %s106, %s107
      %p111 = pneg %p105
      %p112 = scmp.eq.s32.totalorder %s16, 1
      %p113 = por %p111, %p112
      %p114 = scmp.ne.s32.totalorder %s106, %s109
      %p115 = scmp.eq.s32.totalorder %s16, 0
      %p116 = por %p114, %p115
      %p117 = scmp.ne.s32.totalorder %s106, %s109
      %p118 = scmp.eq.s32.totalorder %s21, 1
      %p119 = por %p117, %p118
      %p120 = scmp.ne.s32.totalorder %s109, %s110
      %p121 = scmp.eq.s32.totalorder %s21, 0
      %p122 = por %p120, %p121
      %p123 = scmp.ne.s32.totalorder %s109, %s110
      %p124 = scmp.eq.s32.totalorder %s22, 1
      %p125 = por %p123, %p124
      %p127 = scmp.ne.s32.totalorder %s110, %s126
      %p128 = scmp.eq.s32.totalorder %s22, 0
      %p129 = por %p127, %p128
      %s130 = ssub.s32 %s23, %s49
      %s131 = ssub.s32 %s24, %s45
      %s132 = sor.u32 %s130, %s131
      %s133 = ssub.s32 %s25, %s41
      %s134 = sor.u32 %s132, %s133
      %s135 = ssub.s32 %s26, %s37
      %s136 = sor.u32 %s134, %s135
      %p137 = scmp.eq.s32.totalorder %s136, 0
      %s139 = sadd.s32 %s138, 1
      %s140 = scalar_select %p137, %s138, %s139
      %p143 = pneg %p137
      %p144 = scmp.eq.s32.totalorder %s16, 1
      %p145 = por %p143, %p144
      %p146 = scmp.ne.s32.totalorder %s138, %s141
      %p147 = scmp.eq.s32.totalorder %s16, 0
      %p148 = por %p146, %p147
      %p149 = scmp.ne.s32.totalorder %s138, %s141
      %p150 = scmp.eq.s32.totalorder %s21, 1
      %p151 = por %p149, %p150
      %p152 = scmp.ne.s32.totalorder %s141, %s142
      %p153 = scmp.eq.s32.totalorder %s21, 0
      %p154 = por %p152, %p153
      %p155 = scmp.ne.s32.totalorder %s141, %s142
      %p156 = scmp.eq.s32.totalorder %s22, 1
      %p157 = por %p155, %p156
      %p159 = scmp.ne.s32.totalorder %s142, %s158
      %p160 = scmp.eq.s32.totalorder %s22, 0
      %p161 = por %p159, %p160
      %p162 = scmp.le.s32.totalorder 1, %s16
      %p163 = scmp.lt.s32.totalorder %s16, 3
      %p164 = pnand %p162, %p163
      %p165 = pneg %p164
      // Predicated region
      $region9: #{tpu_custom_call.1} parent=5 // pred_check
        _
      $region10: #{tpu_custom_call.1} parent=5 // pred_check_branch
        %167 = sbr.rel (%p164) target = $region12
      $region11: #{tpu_custom_call.1} parent=5 // pred_region
        %s168 = ssub.s32 %s16, 1
        // Predicated region
        $region13: #{tpu_custom_call.1} parent=11 // pred_check
          %p169 = pneg %p96
        $region14: #{tpu_custom_call.1} parent=11 // pred_check_branch
          %171 = sbr.rel (%p169) target = $region16
        $region15: #{tpu_custom_call.1} parent=11 // pred_region
          %s173 = ssub.s32 4096, 4096
          %174 = vsyncadd [#allocation7], %s173
          %s175 = smul.addr %s28, 64
          %s176 = smul.addr %s175, 64
          %s177 = scalar_lea.hbm %s1, %s176
          %s178 = sshll.u32 [#allocation6], 4
          %s179 = int_to_ptr.vmem [resolvable:$true] %s178
          %184 = dma.hbm_to_vmem [thread:$0]  %s177, 4096, %s179, [#allocation7], 256, 256, 16
        $region16: #{tpu_custom_call.1} parent=11 // pred_fallthru
          _
      $region12: #{tpu_custom_call.1} parent=5 // pred_fallthru
        _
      %p185 = scmp.lt.s32.totalorder %s16, 2
      // Predicated region
      $region17: #{tpu_custom_call.1} parent=5 // pred_check
        %p186 = pneg %p185
      $region18: #{tpu_custom_call.1} parent=5 // pred_check_branch
        %188 = sbr.rel (%p186) target = $region20
      $region19: #{tpu_custom_call.1} parent=5 // pred_region
        // Predicated region
        $region21: #{tpu_custom_call.1} parent=19 // pred_check
          %p189 = pneg %p64
        $region22: #{tpu_custom_call.1} parent=19 // pred_check_branch
          %191 = sbr.rel (%p189) target = $region24
        $region23: #{tpu_custom_call.1} parent=19 // pred_region
          %s192 = sand.u32 %s16, 1
          %s193 = scalar_lea.sflag [#allocation4], %s192
          %s194 = sand.u32 %s54, 1
          %s195 = smul.addr %s194, 4
          %s196 = scalar_lea.vmem [#allocation3], %s195
          %s198 = ssub.s32 64, 64
          %199 = vsyncadd %s193, %s198
          %s200 = sadd.s32 %s25, %s23
          %s201 = smul.addr %s200, 64
          %s202 = scalar_lea.hbm %s0, %s201
          %s204 = sshll.u32 %s196, 4
          %s205 = int_to_ptr.vmem [resolvable:$true] %s204
          %207 = dma.hbm_to_vmem [thread:$0]  %s202, 64, %s205, %s193
        $region24: #{tpu_custom_call.1} parent=19 // pred_fallthru
          _
        // Predicated region
        $region25: #{tpu_custom_call.1} parent=19 // pred_check
          %p208 = pneg %p116
        $region26: #{tpu_custom_call.1} parent=19 // pred_check_branch
          %210 = sbr.rel (%p208) target = $region28
        $region27: #{tpu_custom_call.1} parent=19 // pred_region
          %s211 = sand.u32 %s16, 1
          %s212 = scalar_lea.sflag [#allocation4], %s211
          %s213 = sand.u32 %s106, 1
          %s214 = smul.addr %s213, 64
          %s215 = scalar_lea.vmem [#allocation8], %s214
          %s217 = ssub.s32 1024, 1024
          %218 = vsyncadd %s212, %s217
          %s219 = smul.addr %s23, 16
          %s220 = smul.addr %s219, 64
          %s221 = scalar_lea.hbm %s2, %s220
          %s222 = sshll.u32 %s215, 4
          %s223 = int_to_ptr.vmem [resolvable:$true] %s222
          %228 = dma.hbm_to_vmem [thread:$0]  %s221, 1024, %s223, %s212, 64, 64, 4
        $region28: #{tpu_custom_call.1} parent=19 // pred_fallthru
          _
      $region20: #{tpu_custom_call.1} parent=5 // pred_fallthru
        _
      %p229 = scmp.le.s32.totalorder 1, %s16
      %p230 = scmp.lt.s32.totalorder %s16, 3
      %p231 = pnand %p229, %p230
      %p232 = pneg %p231
      // Predicated region
      $region29: #{tpu_custom_call.1} parent=5 // pred_check
        _
      $region30: #{tpu_custom_call.1} parent=5 // pred_check_branch
        %234 = sbr.rel (%p231) target = $region32
      $region31: #{tpu_custom_call.1} parent=5 // pred_region
        %s235 = ssub.s32 %s16, 1
        %s236 = sand.u32 %s21, 1
        %s237 = scalar_lea.sflag [#allocation4], %s236
        %s238 = sand.u32 %s57, 1
        %s239 = smul.addr %s238, 4
        %s240 = scalar_lea.vmem [#allocation3], %s239
        // Predicated region
        $region33: #{tpu_custom_call.1} parent=31 // pred_check
          %p241 = pneg %p70
        $region34: #{tpu_custom_call.1} parent=31 // pred_check_branch
          %243 = sbr.rel (%p241) target = $region36
        $region35: #{tpu_custom_call.1} parent=31 // pred_region
          %244 = dma.done %s237, 64
        $region36: #{tpu_custom_call.1} parent=31 // pred_fallthru
          _
        // Predicated region
        $region37: #{tpu_custom_call.1} parent=31 // pred_check
          %p245 = pneg %p96
        $region38: #{tpu_custom_call.1} parent=31 // pred_check_branch
          %247 = sbr.rel (%p245) target = $region40
        $region39: #{tpu_custom_call.1} parent=31 // pred_region
          %248 = dma.done [#allocation7], 4096
        $region40: #{tpu_custom_call.1} parent=31 // pred_fallthru
          _
        %s249 = sand.u32 %s21, 1
        %s250 = scalar_lea.sflag [#allocation4], %s249
        %s251 = sand.u32 %s109, 1
        %s252 = smul.addr %s251, 64
        %s253 = scalar_lea.vmem [#allocation8], %s252
        // Predicated region
        $region41: #{tpu_custom_call.1} parent=31 // pred_check
          %p254 = pneg %p122
        $region42: #{tpu_custom_call.1} parent=31 // pred_check_branch
          %256 = sbr.rel (%p254) target = $region44
        $region43: #{tpu_custom_call.1} parent=31 // pred_region
          %257 = dma.done %s250, 1024
        $region44: #{tpu_custom_call.1} parent=31 // pred_fallthru
          _
        %s258 = sand.u32 %s21, 1
        %s259 = scalar_lea.sflag [#allocation4], %s258
        %s260 = sand.u32 %s57, 1
        %s261 = smul.addr %s260, 4
        %s262 = scalar_lea.vmem [#allocation3], %s261
        %p263 = pneg %p70
        %p264 = pneg %p67
        %p265 = pneg %p96
        %p266 = pneg %p93
        %s267 = sand.u32 %s21, 1
        %s268 = scalar_lea.sflag [#allocation4], %s267
        %s269 = sand.u32 %s109, 1
        %s270 = smul.addr %s269, 64
        %s271 = scalar_lea.vmem [#allocation8], %s270
        %p272 = pneg %p122
        %p273 = pneg %p119
        %p274 = pneg %p154
        %p275 = pneg %p151
        %s276 = sand.u32 %s141, 1
        %s277 = scalar_lea.sflag [#allocation5], %s276
        %s278 = sand.u32 %s141, 1
        %s279 = smul.addr %s278, 32
        %s280 = scalar_lea.vmem [#allocation9], %s279
        %s281 = smul.u32 4, %s28
        %p283 = scmp.eq.s32.totalorder %s30, 0
        // Predicated region
        $region45: #{tpu_custom_call.1} parent=31 // pred_check
          %p284 = pneg %p283
        $region46: #{tpu_custom_call.1} parent=31 // pred_check_branch
          %286 = sbr.rel (%p284) target = $region48
        $region47: #{tpu_custom_call.1} parent=31 // pred_region
          %v287 = vld [vmem:[%s240] sm:$0xf]
          %v288 = vld [vmem:[#allocation6] sm:$0xff]
          %v289 = vld [vmem:[#allocation6 + $0x8] sm:$0xff]
          %v290 = vld [vmem:[#allocation6 + $0x10] sm:$0xff]
          %v291 = vld [vmem:[#allocation6 + $0x18] sm:$0xff]
          %v292 = vld [vmem:[#allocation6 + $0x20] sm:$0xff]
          %v293 = vld [vmem:[#allocation6 + $0x28] sm:$0xff]
          %v294 = vld [vmem:[#allocation6 + $0x30] sm:$0xff]
          %v295 = vld [vmem:[#allocation6 + $0x38] sm:$0xff]
          %v296 = vld [vmem:[#allocation6 + $0x40] sm:$0xff]
          %v297 = vld [vmem:[#allocation6 + $0x48] sm:$0xff]
          %v298 = vld [vmem:[#allocation6 + $0x50] sm:$0xff]
          %v299 = vld [vmem:[#allocation6 + $0x58] sm:$0xff]
          %v300 = vld [vmem:[#allocation6 + $0x60] sm:$0xff]
          %v301 = vld [vmem:[#allocation6 + $0x68] sm:$0xff]
          %v302 = vld [vmem:[#allocation6 + $0x70] sm:$0xff]
          %v303 = vld [vmem:[#allocation6 + $0x78] sm:$0xff]
          %v304 = vld [vmem:[#allocation6 + $0x80] sm:$0xff]
          %v305 = vld [vmem:[#allocation6 + $0x88] sm:$0xff]
          %v306 = vld [vmem:[#allocation6 + $0x90] sm:$0xff]
          %v307 = vld [vmem:[#allocation6 + $0x98] sm:$0xff]
          %v308 = vld [vmem:[#allocation6 + $0xa0] sm:$0xff]
          %v309 = vld [vmem:[#allocation6 + $0xa8] sm:$0xff]
          %v310 = vld [vmem:[#allocation6 + $0xb0] sm:$0xff]
          %v311 = vld [vmem:[#allocation6 + $0xb8] sm:$0xff]
          %v312 = vld [vmem:[#allocation6 + $0xc0] sm:$0xff]
          %v313 = vld [vmem:[#allocation6 + $0xc8] sm:$0xff]
          %v314 = vld [vmem:[#allocation6 + $0xd0] sm:$0xff]
          %v315 = vld [vmem:[#allocation6 + $0xd8] sm:$0xff]
          %v316 = vld [vmem:[#allocation6 + $0xe0] sm:$0xff]
          %v317 = vld [vmem:[#allocation6 + $0xe8] sm:$0xff]
          %v318 = vld [vmem:[#allocation6 + $0xf0] sm:$0xff]
          %v319 = vld [vmem:[#allocation6 + $0xf8] sm:$0xff]
          %v352 = vunpack.c.l.b16 %v288
          %v353 = vunpack.c.h.b16 %v288
          %v354 = vunpack.c.l.b16 %v289
          %v355 = vunpack.c.h.b16 %v289
          %v356 = vunpack.c.l.b16 %v290
          %v357 = vunpack.c.h.b16 %v290
          %v358 = vunpack.c.l.b16 %v291
          %v359 = vunpack.c.h.b16 %v291
          %v360 = vunpack.c.l.b16 %v292
          %v361 = vunpack.c.h.b16 %v292
          %v362 = vunpack.c.l.b16 %v293
          %v363 = vunpack.c.h.b16 %v293
          %v364 = vunpack.c.l.b16 %v294
          %v365 = vunpack.c.h.b16 %v294
          %v366 = vunpack.c.l.b16 %v295
          %v367 = vunpack.c.h.b16 %v295
          %v368 = vunpack.c.l.b16 %v296
          %v369 = vunpack.c.h.b16 %v296
          %v370 = vunpack.c.l.b16 %v297
          %v371 = vunpack.c.h.b16 %v297
          %v372 = vunpack.c.l.b16 %v298
          %v373 = vunpack.c.h.b16 %v298
          %v374 = vunpack.c.l.b16 %v299
          %v375 = vunpack.c.h.b16 %v299
          %v376 = vunpack.c.l.b16 %v300
          %v377 = vunpack.c.h.b16 %v300
          %v378 = vunpack.c.l.b16 %v301
          %v379 = vunpack.c.h.b16 %v301
          %v380 = vunpack.c.l.b16 %v302
          %v381 = vunpack.c.h.b16 %v302
          %v382 = vunpack.c.l.b16 %v303
          %v383 = vunpack.c.h.b16 %v303
          %v384 = vunpack.c.l.b16 %v304
          %v385 = vunpack.c.h.b16 %v304
          %v386 = vunpack.c.l.b16 %v305
          %v387 = vunpack.c.h.b16 %v305
          %v388 = vunpack.c.l.b16 %v306
          %v389 = vunpack.c.h.b16 %v306
          %v390 = vunpack.c.l.b16 %v307
          %v391 = vunpack.c.h.b16 %v307
          %v392 = vunpack.c.l.b16 %v308
          %v393 = vunpack.c.h.b16 %v308
          %v394 = vunpack.c.l.b16 %v309
          %v395 = vunpack.c.h.b16 %v309
          %v396 = vunpack.c.l.b16 %v310
          %v397 = vunpack.c.h.b16 %v310
          %v398 = vunpack.c.l.b16 %v311
          %v399 = vunpack.c.h.b16 %v311
          %v400 = vunpack.c.l.b16 %v312
          %v401 = vunpack.c.h.b16 %v312
          %v402 = vunpack.c.l.b16 %v313
          %v403 = vunpack.c.h.b16 %v313
          %v404 = vunpack.c.l.b16 %v314
          %v405 = vunpack.c.h.b16 %v314
          %v406 = vunpack.c.l.b16 %v315
          %v407 = vunpack.c.h.b16 %v315
          %v408 = vunpack.c.l.b16 %v316
          %v409 = vunpack.c.h.b16 %v316
          %v410 = vunpack.c.l.b16 %v317
          %v411 = vunpack.c.h.b16 %v317
          %v412 = vunpack.c.l.b16 %v318
          %v413 = vunpack.c.h.b16 %v318
          %v414 = vunpack.c.l.b16 %v319
          %v415 = vunpack.c.h.b16 %v319
          %v416 = vpack.c.b16 %v356, %v352
          %v417 = vpack.c.b16 %v357, %v353
          %v418 = vpack.c.b16 %v358, %v354
          %v419 = vpack.c.b16 %v359, %v355
          %v420 = vpack.c.b16 %v364, %v360
          %v421 = vpack.c.b16 %v365, %v361
          %v422 = vpack.c.b16 %v366, %v362
          %v423 = vpack.c.b16 %v367, %v363
          %v424 = vpack.c.b16 %v372, %v368
          %v425 = vpack.c.b16 %v373, %v369
          %v426 = vpack.c.b16 %v374, %v370
          %v427 = vpack.c.b16 %v375, %v371
          %v428 = vpack.c.b16 %v380, %v376
          %v429 = vpack.c.b16 %v381, %v377
          %v430 = vpack.c.b16 %v382, %v378
          %v431 = vpack.c.b16 %v383, %v379
          %v432 = vpack.c.b16 %v388, %v384
          %v433 = vpack.c.b16 %v389, %v385
          %v434 = vpack.c.b16 %v390, %v386
          %v435 = vpack.c.b16 %v391, %v387
          %v436 = vpack.c.b16 %v396, %v392
          %v437 = vpack.c.b16 %v397, %v393
          %v438 = vpack.c.b16 %v398, %v394
          %v439 = vpack.c.b16 %v399, %v395
          %v440 = vpack.c.b16 %v404, %v400
          %v441 = vpack.c.b16 %v405, %v401
          %v442 = vpack.c.b16 %v406, %v402
          %v443 = vpack.c.b16 %v407, %v403
          %v444 = vpack.c.b16 %v412, %v408
          %v445 = vpack.c.b16 %v413, %v409
          %v446 = vpack.c.b16 %v414, %v410
          %v447 = vpack.c.b16 %v415, %v411
          %480 = vmatprep.subr.bf16.mxu0 %v445
          %481 = vmatpush1.bf16.msra.mxu0 %v444
          %482 = vmatprep.subr.bf16.mxu0 %v441
          %483 = vmatpush1.bf16.msra.mxu0 %v440
          %484 = vmatprep.subr.bf16.mxu0 %v437
          %485 = vmatpush1.bf16.msra.mxu0 %v436
          %486 = vmatprep.subr.bf16.mxu0 %v433
          %487 = vmatpush1.bf16.msra.mxu0 %v432
          %488 = vmatprep.subr.bf16.mxu0 %v429
          %489 = vmatpush1.bf16.msra.mxu0 %v428
          %490 = vmatprep.subr.bf16.mxu0 %v425
          %491 = vmatpush1.bf16.msra.mxu0 %v424
          %492 = vmatprep.subr.bf16.mxu0 %v421
          %493 = vmatpush1.bf16.msra.mxu0 %v420
          %494 = vmatprep.subr.bf16.mxu0 %v417
          %495 = vmatpush1.bf16.msra.mxu0 %v416
          %496 = vmatprep.subr.bf16.mxu0 0
          %497 = vmatpush2.bf16.msra.mxu0 0
          %498 = vmatprep.subr.bf16.mxu0 0
          %499 = vmatpush2.bf16.msra.mxu0 0
          %500 = vmatprep.subr.bf16.mxu0 0
          %501 = vmatpush2.bf16.msra.mxu0 0
          %502 = vmatprep.subr.bf16.mxu0 0
          %503 = vmatpush2.bf16.msra.mxu0 0
          %504 = vmatprep.subr.bf16.mxu0 0
          %505 = vmatpush2.bf16.msra.mxu0 0
          %506 = vmatprep.subr.bf16.mxu0 0
          %507 = vmatpush2.bf16.msra.mxu0 0
          %508 = vmatprep.subr.bf16.mxu0 0
          %509 = vmatpush2.bf16.msra.mxu0 0
          %510 = vmatprep.subr.bf16.mxu0 0
          %511 = vmatpush2.bf16.msra.mxu0 0
          %512 = vmatprep.mubr.bf16.mxu0 0
          %513 = vmatmul.mubr.bf16.gmra.mxu0 %v287
          %v514 = vpop.f32.mrf.mxu0
          %v515 = vadd.f32 0.0, %v514
          %v516 = vpop.f32.mrf.mxu0
          %v517 = vadd.f32 0.0, %v516
          %v518 = vpop.f32.mrf.mxu0
          %v519 = vpop.f32.mrf.mxu0
          %520 = vdwg.mxu0
          %521 = vmatprep.subr.bf16.mxu0 %v447
          %522 = vmatpush1.bf16.msra.mxu0 %v446
          %523 = vmatprep.subr.bf16.mxu0 %v443
          %524 = vmatpush1.bf16.msra.mxu0 %v442
          %525 = vmatprep.subr.bf16.mxu0 %v439
          %526 = vmatpush1.bf16.msra.mxu0 %v438
          %527 = vmatprep.subr.bf16.mxu0 %v435
          %528 = vmatpush1.bf16.msra.mxu0 %v434
          %529 = vmatprep.subr.bf16.mxu0 %v431
          %530 = vmatpush1.bf16.msra.mxu0 %v430
          %531 = vmatprep.subr.bf16.mxu0 %v427
          %532 = vmatpush1.bf16.msra.mxu0 %v426
          %533 = vmatprep.subr.bf16.mxu0 %v423
          %534 = vmatpush1.bf16.msra.mxu0 %v422
          %535 = vmatprep.subr.bf16.mxu0 %v419
          %536 = vmatpush1.bf16.msra.mxu0 %v418
          %537 = vmatprep.subr.bf16.mxu0 0
          %538 = vmatpush2.bf16.msra.mxu0 0
          %539 = vmatprep.subr.bf16.mxu0 0
          %540 = vmatpush2.bf16.msra.mxu0 0
          %541 = vmatprep.subr.bf16.mxu0 0
          %542 = vmatpush2.bf16.msra.mxu0 0
          %543 = vmatprep.subr.bf16.mxu0 0
          %544 = vmatpush2.bf16.msra.mxu0 0
          %545 = vmatprep.subr.bf16.mxu0 0
          %546 = vmatpush2.bf16.msra.mxu0 0
          %547 = vmatprep.subr.bf16.mxu0 0
          %548 = vmatpush2.bf16.msra.mxu0 0
          %549 = vmatprep.subr.bf16.mxu0 0
          %550 = vmatpush2.bf16.msra.mxu0 0
          %551 = vmatprep.subr.bf16.mxu0 0
          %552 = vmatpush2.bf16.msra.mxu0 0
          %553 = vmatprep.mubr.bf16.mxu0 0
          %554 = vmatmul.mubr.bf16.gmra.mxu0 %v287
          %v555 = vpop.f32.mrf.mxu0
          %v556 = vadd.f32 0.0, %v555
          %v557 = vpop.f32.mrf.mxu0
          %v558 = vadd.f32 0.0, %v557
          %v559 = vpop.f32.mrf.mxu0
          %v560 = vpop.f32.mrf.mxu0
          %561 = vdwg.mxu0
          %v562 = vpack.c.bf16 %v515, %v515
          %v563 = vpack.c.bf16 %v517, %v517
          %v564 = vpack.c.bf16 %v556, %v556
          %v565 = vpack.c.bf16 %v558, %v558
          %v570 = vunpack.c.l.b16 %v562
          %v571 = vunpack.c.l.b16 %v563
          %v572 = vunpack.c.l.b16 %v564
          %v573 = vunpack.c.l.b16 %v565
          %v574 = vpack.c.b16 %v571, %v570
          %v575 = vpack.c.b16 %v573, %v572
          %578 = vst [vmem:[#allocation2] sm:$0xff] %v574
          %579 = vst [vmem:[#allocation2 + $0x8] sm:$0xff] %v575
        $region48: #{tpu_custom_call.1} parent=31 // pred_fallthru
          _
        %s580 = smul.u32 %s30, 128
        %s581 = sshra.s32 %s580, 3
        %s582 = sand.u32 %s580, 7
        %s583 = smul.addr %s581, 4
        %s584 = scalar_lea.vmem %s253, %s583 [#allocation8]
        %v585 = vld [vmem:[%s584] sm:$0xf]
        %v586 = vld [vmem:[%s584 + $0x4] sm:$0xf]
        %v587 = vld [vmem:[%s584 + $0x8] sm:$0xf]
        %v588 = vld [vmem:[%s584 + $0xc] sm:$0xf]
        %v589 = vld [vmem:[%s584 + $0x10] sm:$0xf]
        %v590 = vld [vmem:[%s584 + $0x14] sm:$0xf]
        %v591 = vld [vmem:[%s584 + $0x18] sm:$0xf]
        %v592 = vld [vmem:[%s584 + $0x1c] sm:$0xf]
        %v593 = vld [vmem:[%s584 + $0x20] sm:$0xf]
        %v594 = vld [vmem:[%s584 + $0x24] sm:$0xf]
        %v595 = vld [vmem:[%s584 + $0x28] sm:$0xf]
        %v596 = vld [vmem:[%s584 + $0x2c] sm:$0xf]
        %v597 = vld [vmem:[%s584 + $0x30] sm:$0xf]
        %v598 = vld [vmem:[%s584 + $0x34] sm:$0xf]
        %v599 = vld [vmem:[%s584 + $0x38] sm:$0xf]
        %v600 = vld [vmem:[%s584 + $0x3c] sm:$0xf]
        %v601 = vld [vmem:[#allocation2] sm:$0xf]
        %v618 = vunpack.c.l.b16 %v585
        %v619 = vunpack.c.l.b16 %v586
        %v620 = vunpack.c.l.b16 %v587
        %v621 = vunpack.c.l.b16 %v588
        %v622 = vunpack.c.l.b16 %v589
        %v623 = vunpack.c.l.b16 %v590
        %v624 = vunpack.c.l.b16 %v591
        %v625 = vunpack.c.l.b16 %v592
        %v626 = vunpack.c.l.b16 %v593
        %v627 = vunpack.c.l.b16 %v594
        %v628 = vunpack.c.l.b16 %v595
        %v629 = vunpack.c.l.b16 %v596
        %v630 = vunpack.c.l.b16 %v597
        %v631 = vunpack.c.l.b16 %v598
        %v632 = vunpack.c.l.b16 %v599
        %v633 = vunpack.c.l.b16 %v600
        %v634 = vpack.c.b16 %v619, %v618
        %v635 = vpack.c.b16 %v621, %v620
        %v636 = vpack.c.b16 %v623, %v622
        %v637 = vpack.c.b16 %v625, %v624
        %v638 = vpack.c.b16 %v627, %v626
        %v639 = vpack.c.b16 %v629, %v628
        %v640 = vpack.c.b16 %v631, %v630
        %v641 = vpack.c.b16 %v633, %v632
        %650 = vmatprep.subr.bf16.mxu0 0
        %651 = vmatpush1.bf16.xpose.msra.mxu0 %v641
        %652 = vmatprep.subr.bf16.mxu0 0
        %653 = vmatpush1.bf16.xpose.msra.mxu0 %v640
        %654 = vmatprep.subr.bf16.mxu0 0
        %655 = vmatpush1.bf16.xpose.msra.mxu0 %v639
        %656 = vmatprep.subr.bf16.mxu0 0
        %657 = vmatpush1.bf16.xpose.msra.mxu0 %v638
        %658 = vmatprep.subr.bf16.mxu0 0
        %659 = vmatpush1.bf16.xpose.msra.mxu0 %v637
        %660 = vmatprep.subr.bf16.mxu0 0
        %661 = vmatpush1.bf16.xpose.msra.mxu0 %v636
        %662 = vmatprep.subr.bf16.mxu0 0
        %663 = vmatpush1.bf16.xpose.msra.mxu0 %v635
        %664 = vmatprep.subr.bf16.mxu0 0
        %665 = vmatpush1.bf16.xpose.msra.mxu0 %v634
        %666 = vmatprep.subr.bf16.mxu0 0
        %667 = vmatpush2.bf16.xpose.msra.mxu0 0
        %668 = vmatprep.subr.bf16.mxu0 0
        %669 = vmatpush2.bf16.xpose.msra.mxu0 0
        %670 = vmatprep.subr.bf16.mxu0 0
        %671 = vmatpush2.bf16.xpose.msra.mxu0 0
        %672 = vmatprep.subr.bf16.mxu0 0
        %673 = vmatpush2.bf16.xpose.msra.mxu0 0
        %674 = vmatprep.subr.bf16.mxu0 0
        %675 = vmatpush2.bf16.xpose.msra.mxu0 0
        %676 = vmatprep.subr.bf16.mxu0 0
        %677 = vmatpush2.bf16.xpose.msra.mxu0 0
        %678 = vmatprep.subr.bf16.mxu0 0
        %679 = vmatpush2.bf16.xpose.msra.mxu0 0
        %680 = vmatprep.subr.bf16.mxu0 0
        %681 = vmatpush2.bf16.xpose.msra.mxu0 0
        %682 = vmatprep.mubr.bf16.mxu0 0
        %683 = vmatmul.mubr.bf16.gmra.mxu0 %v601
        %v684 = vpop.f32.mrf.mxu0
        %v685 = vadd.f32 0.0, %v684
        %v686 = vpop.f32.mrf.mxu0
        %v687 = vpop.f32.mrf.mxu0
        %v688 = vpop.f32.mrf.mxu0
        %689 = vdwg.mxu0
        %690 = vst [vmem:[%s280] sm:$0xff] %v685
        %v691 = vld [vmem:[#allocation2 + $0x4] sm:$0xf]
        %692 = vmatprep.subr.bf16.mxu0 0
        %693 = vmatpush1.bf16.xpose.msra.mxu0 %v641
        %694 = vmatprep.subr.bf16.mxu0 0
        %695 = vmatpush1.bf16.xpose.msra.mxu0 %v640
        %696 = vmatprep.subr.bf16.mxu0 0
        %697 = vmatpush1.bf16.xpose.msra.mxu0 %v639
        %698 = vmatprep.subr.bf16.mxu0 0
        %699 = vmatpush1.bf16.xpose.msra.mxu0 %v638
        %700 = vmatprep.subr.bf16.mxu0 0
        %701 = vmatpush1.bf16.xpose.msra.mxu0 %v637
        %702 = vmatprep.subr.bf16.mxu0 0
        %703 = vmatpush1.bf16.xpose.msra.mxu0 %v636
        %704 = vmatprep.subr.bf16.mxu0 0
        %705 = vmatpush1.bf16.xpose.msra.mxu0 %v635
        %706 = vmatprep.subr.bf16.mxu0 0
        %707 = vmatpush1.bf16.xpose.msra.mxu0 %v634
        %708 = vmatprep.subr.bf16.mxu0 0
        %709 = vmatpush2.bf16.xpose.msra.mxu0 0
        %710 = vmatprep.subr.bf16.mxu0 0
        %711 = vmatpush2.bf16.xpose.msra.mxu0 0
        %712 = vmatprep.subr.bf16.mxu0 0
        %713 = vmatpush2.bf16.xpose.msra.mxu0 0
        %714 = vmatprep.subr.bf16.mxu0 0
        %715 = vmatpush2.bf16.xpose.msra.mxu0 0
        %716 = vmatprep.subr.bf16.mxu0 0
        %717 = vmatpush2.bf16.xpose.msra.mxu0 0
        %718 = vmatprep.subr.bf16.mxu0 0
        %719 = vmatpush2.bf16.xpose.msra.mxu0 0
        %720 = vmatprep.subr.bf16.mxu0 0
        %721 = vmatpush2.bf16.xpose.msra.mxu0 0
        %722 = vmatprep.subr.bf16.mxu0 0
        %723 = vmatpush2.bf16.xpose.msra.mxu0 0
        %724 = vmatprep.mubr.bf16.mxu0 0
        %725 = vmatmul.mubr.bf16.gmra.mxu0 %v691
        %v726 = vpop.f32.mrf.mxu0
        %v727 = vadd.f32 0.0, %v726
        %v728 = vpop.f32.mrf.mxu0
        %v729 = vpop.f32.mrf.mxu0
        %v730 = vpop.f32.mrf.mxu0
        %731 = vdwg.mxu0
        %s732 = scalar_lea.vmem %s280, 8 [#allocation9]
        %733 = vst [vmem:[%s732] sm:$0xff] %v727
        %v734 = vld [vmem:[#allocation2 + $0x8] sm:$0xf]
        %735 = vmatprep.subr.bf16.mxu0 0
        %736 = vmatpush1.bf16.xpose.msra.mxu0 %v641
        %737 = vmatprep.subr.bf16.mxu0 0
        %738 = vmatpush1.bf16.xpose.msra.mxu0 %v640
        %739 = vmatprep.subr.bf16.mxu0 0
        %740 = vmatpush1.bf16.xpose.msra.mxu0 %v639
        %741 = vmatprep.subr.bf16.mxu0 0
        %742 = vmatpush1.bf16.xpose.msra.mxu0 %v638
        %743 = vmatprep.subr.bf16.mxu0 0
        %744 = vmatpush1.bf16.xpose.msra.mxu0 %v637
        %745 = vmatprep.subr.bf16.mxu0 0
        %746 = vmatpush1.bf16.xpose.msra.mxu0 %v636
        %747 = vmatprep.subr.bf16.mxu0 0
        %748 = vmatpush1.bf16.xpose.msra.mxu0 %v635
        %749 = vmatprep.subr.bf16.mxu0 0
        %750 = vmatpush1.bf16.xpose.msra.mxu0 %v634
        %751 = vmatprep.subr.bf16.mxu0 0
        %752 = vmatpush2.bf16.xpose.msra.mxu0 0
        %753 = vmatprep.subr.bf16.mxu0 0
        %754 = vmatpush2.bf16.xpose.msra.mxu0 0
        %755 = vmatprep.subr.bf16.mxu0 0
        %756 = vmatpush2.bf16.xpose.msra.mxu0 0
        %757 = vmatprep.subr.bf16.mxu0 0
        %758 = vmatpush2.bf16.xpose.msra.mxu0 0
        %759 = vmatprep.subr.bf16.mxu0 0
        %760 = vmatpush2.bf16.xpose.msra.mxu0 0
        %761 = vmatprep.subr.bf16.mxu0 0
        %762 = vmatpush2.bf16.xpose.msra.mxu0 0
        %763 = vmatprep.subr.bf16.mxu0 0
        %764 = vmatpush2.bf16.xpose.msra.mxu0 0
        %765 = vmatprep.subr.bf16.mxu0 0
        %766 = vmatpush2.bf16.xpose.msra.mxu0 0
        %767 = vmatprep.mubr.bf16.mxu0 0
        %768 = vmatmul.mubr.bf16.gmra.mxu0 %v734
        %v769 = vpop.f32.mrf.mxu0
        %v770 = vadd.f32 0.0, %v769
        %v771 = vpop.f32.mrf.mxu0
        %v772 = vpop.f32.mrf.mxu0
        %v773 = vpop.f32.mrf.mxu0
        %774 = vdwg.mxu0
        %s775 = scalar_lea.vmem %s280, 16 [#allocation9]
        %776 = vst [vmem:[%s775] sm:$0xff] %v770
        %v777 = vld [vmem:[#allocation2 + $0xc] sm:$0xf]
        %778 = vmatprep.subr.bf16.mxu0 0
        %779 = vmatpush1.bf16.xpose.msra.mxu0 %v641
        %780 = vmatprep.subr.bf16.mxu0 0
        %781 = vmatpush1.bf16.xpose.msra.mxu0 %v640
        %782 = vmatprep.subr.bf16.mxu0 0
        %783 = vmatpush1.bf16.xpose.msra.mxu0 %v639
        %784 = vmatprep.subr.bf16.mxu0 0
        %785 = vmatpush1.bf16.xpose.msra.mxu0 %v638
        %786 = vmatprep.subr.bf16.mxu0 0
        %787 = vmatpush1.bf16.xpose.msra.mxu0 %v637
        %788 = vmatprep.subr.bf16.mxu0 0
        %789 = vmatpush1.bf16.xpose.msra.mxu0 %v636
        %790 = vmatprep.subr.bf16.mxu0 0
        %791 = vmatpush1.bf16.xpose.msra.mxu0 %v635
        %792 = vmatprep.subr.bf16.mxu0 0
        %793 = vmatpush1.bf16.xpose.msra.mxu0 %v634
        %794 = vmatprep.subr.bf16.mxu0 0
        %795 = vmatpush2.bf16.xpose.msra.mxu0 0
        %796 = vmatprep.subr.bf16.mxu0 0
        %797 = vmatpush2.bf16.xpose.msra.mxu0 0
        %798 = vmatprep.subr.bf16.mxu0 0
        %799 = vmatpush2.bf16.xpose.msra.mxu0 0
        %800 = vmatprep.subr.bf16.mxu0 0
        %801 = vmatpush2.bf16.xpose.msra.mxu0 0
        %802 = vmatprep.subr.bf16.mxu0 0
        %803 = vmatpush2.bf16.xpose.msra.mxu0 0
        %804 = vmatprep.subr.bf16.mxu0 0
        %805 = vmatpush2.bf16.xpose.msra.mxu0 0
        %806 = vmatprep.subr.bf16.mxu0 0
        %807 = vmatpush2.bf16.xpose.msra.mxu0 0
        %808 = vmatprep.subr.bf16.mxu0 0
        %809 = vmatpush2.bf16.xpose.msra.mxu0 0
        %810 = vmatprep.mubr.bf16.mxu0 0
        %811 = vmatmul.mubr.bf16.gmra.mxu0 %v777
        %v812 = vpop.f32.mrf.mxu0
        %v813 = vadd.f32 0.0, %v812
        %v814 = vpop.f32.mrf.mxu0
        %v815 = vpop.f32.mrf.mxu0
        %v816 = vpop.f32.mrf.mxu0
        %817 = vdwg.mxu0
        %s818 = scalar_lea.vmem %s280, 24 [#allocation9]
        %819 = vst [vmem:[%s818] sm:$0xff] %v813
        %s820 = sand.u32 %s141, 1
        %s821 = scalar_lea.sflag [#allocation5], %s820
        %s822 = sand.u32 %s141, 1
        %s823 = smul.addr %s822, 32
        %s824 = scalar_lea.vmem [#allocation9], %s823
        // Predicated region
        $region49: #{tpu_custom_call.1} parent=31 // pred_check
          %p825 = pneg %p151
        $region50: #{tpu_custom_call.1} parent=31 // pred_check_branch
          %827 = sbr.rel (%p825) target = $region52
        $region51: #{tpu_custom_call.1} parent=31 // pred_region
          %s828 = smul.u32 4, %s28
          %s830 = ssub.s32 512, 512
          %831 = vsyncadd %s821, %s830
          %s832 = sadd.s32 %s30, %s29
          %s833 = sadd.s32 %s832, %s828
          %s834 = smul.addr %s27, 4
          %s835 = sadd.s32 %s833, %s834
          %s836 = smul.addr %s835, 128
          %s837 = scalar_lea.hbm %s3, %s836
          %s838 = sshll.u32 %s824, 4
          %s839 = int_to_ptr.vmem [resolvable:$true] %s838
          %844 = dma.vmem_to_hbm [thread:$0]  %s839, 512, %s837, %s821, 128, 128, 8
        $region52: #{tpu_custom_call.1} parent=31 // pred_fallthru
          _
      $region32: #{tpu_custom_call.1} parent=5 // pred_fallthru
        _
      %p845 = scmp.le.s32.totalorder 2, %s16
      // Predicated region
      $region53: #{tpu_custom_call.1} parent=5 // pred_check
        %p846 = pneg %p845
      $region54: #{tpu_custom_call.1} parent=5 // pred_check_branch
        %848 = sbr.rel (%p846) target = $region56
      $region55: #{tpu_custom_call.1} parent=5 // pred_region
        %s849 = ssub.s32 %s16, 2
        // Predicated region
        $region57: #{tpu_custom_call.1} parent=55 // pred_check
          %p850 = pneg %p157
        $region58: #{tpu_custom_call.1} parent=55 // pred_check_branch
          %852 = sbr.rel (%p850) target = $region60
        $region59: #{tpu_custom_call.1} parent=55 // pred_region
          %s853 = sand.u32 %s142, 1
          %s854 = scalar_lea.sflag [#allocation5], %s853
          %s855 = sand.u32 %s142, 1
          %s856 = smul.addr %s855, 32
          %s857 = scalar_lea.vmem [#allocation9], %s856
          %858 = dma.done %s854, 512
        $region60: #{tpu_custom_call.1} parent=55 // pred_fallthru
          _
      $region56: #{tpu_custom_call.1} parent=5 // pred_fallthru
        _
    $region6: #{tpu_custom_call.1} parent=1 // loop_footer
      %s20 = sadd.s32 1, %s16
    $region7: #{tpu_custom_call.1} parent=1 // loop_footer_branch
      %15 = sbr.rel target = $region3
    $region8: #{tpu_custom_call.1} parent=1 // loop_exit
      _
    %859 = vsyncpa [#allocation4], 1
    %s860 = scalar_lea.sflag [#allocation4], 1
    %861 = vsyncpa %s860, 1
    %862 = vsyncpa [#allocation7], 1
    %863 = vsyncpa [#allocation5], 1
    %s864 = scalar_lea.sflag [#allocation5], 1
    %865 = vsyncpa %s864, 1

</llo_original>
